<compile_context>
chip_gen: v7x
topology: tpu7x:2x2x1
jax: 0.10.0
libtpu: 0.0.40
codegen_flags: <defaults>
</compile_context>

<pallas_src>
import functools
import math

import numpy as np

import jax
import jax.numpy as jnp
from jax import lax
from jax.experimental import pallas as pl
from jax.experimental.pallas import tpu as pltpu

LANE = 128              # TPU lane width  -> lane-dense stores
SUBLANE = 8             # f32 sublanes    -> sublane-dense slab rows
MAX_HISTORY = 64        # fixed early-stopping loss-buffer length (one compile, reused)

_LN_0P1 = math.log(0.1)


# ----------------------------------------------------------------------------
# Kernel 1: "type1" learning-rate schedule.
#   lr[e] = base_lr * 0.1 ** ((start + e - 1) // 10)
# Inputs are two SMEM scalars (start epoch, base_lr); the epoch grid is generated
# in-kernel, so the kernel is compute-only + one unmasked lane/sublane-dense store.
# ----------------------------------------------------------------------------
def _lr_type1_kernel(start_ref, base_ref, out_ref):
    rows, cols = out_ref.shape                      # static (8k, 128)
    row = lax.broadcasted_iota(jnp.int32, (rows, cols), 0)
    col = lax.broadcasted_iota(jnp.int32, (rows, cols), 1)
    # e = epoch - 1, generated in-kernel (no input DMA); exact in f32 below 2**24.
    e = ((start_ref[0] - jnp.int32(1)) + row * jnp.int32(cols) + col).astype(jnp.float32)
    # Exact floor(e / 10): multiply by 0.1f then a +/-1 correction.  Avoids the
    # approximate EUP-reciprocal f32 divide (which can land one decade off at
    # epoch = 11, 21, ...) and avoids relying on vector int32 division lowering.
    k = jnp.floor(e * jnp.float32(0.1))
    k = jnp.where(k * jnp.float32(10.0) > e, k - jnp.float32(1.0), k)
    k = jnp.where((k + jnp.float32(1.0)) * jnp.float32(10.0) <= e, k + jnp.float32(1.0), k)
    # 0.1 ** k on the EUP as exp(k * ln 0.1); a few f32 ULPs off exact pow and it
    # underflows to 0 for k >= ~38 (epoch ~380+) -- fine for an LR schedule.
    out_ref[...] = base_ref[0] * jnp.exp(k * jnp.float32(_LN_0P1))


@functools.partial(jax.jit, static_argnames=("num_epochs",))
def adjust_learning_rate_type1(start_epoch, base_lr, *, num_epochs):
    """lr[i] for epochs [start_epoch, start_epoch + num_epochs) -> (num_epochs,) f32."""
    rows = max(SUBLANE, pl.cdiv(num_epochs, LANE * SUBLANE) * SUBLANE)  # dense slab
    start = jnp.asarray(start_epoch, jnp.int32).reshape(1)
    base = jnp.asarray(base_lr, jnp.float32).reshape(1)
    slab = pl.pallas_call(
        _lr_type1_kernel,
        out_shape=jax.ShapeDtypeStruct((rows, LANE), jnp.float32),
        in_specs=[pl.BlockSpec(memory_space=pltpu.MemorySpace.SMEM)] * 2,
        out_specs=pl.BlockSpec(memory_space=pltpu.MemorySpace.VMEM),
    )(start, base)
    # reshape + slice fuse around the custom call under jit (no standalone dispatches).
    return slab.reshape(-1)[:num_epochs]


# ----------------------------------------------------------------------------
# Kernel 2: fused EarlyStopping over a validation-loss history (one launch).
#
# fstate (2,) f32 SMEM:  0: best_score   1: val_loss_min
# istate (4,) i32 SMEM:  0: counter      1: early_stop(0/1)
#                        2: has_best(0/1; stands in for `best_score is None`)  3: pad
# vloss  (MAX_HISTORY,) f32 SMEM, padded; n (1,) i32 SMEM is the real length.
# delta  (1,) f32 SMEM;  patience (1,) i32 SMEM.
# Fixed shapes -> one Mosaic compile, reused for every history length.
# ----------------------------------------------------------------------------
def _early_stopping_kernel(fstate_ref, istate_ref, vloss_ref, n_ref,
                           delta_ref, patience_ref, fout_ref, iout_ref):
    delta = delta_ref[0]
    patience = patience_ref[0]
    n = n_ref[0]                                   # runtime trip count

    def body(i, carry):
        best, vmin, counter, stop, has_best = carry
        vl = vloss_ref[i]
        score = -vl
        # PyTorch: improve iff (best_score is None) or not (score < best + delta).
        improved = jnp.logical_or(has_best == jnp.int32(0), score >= best + delta)
        best = jnp.where(improved, score, best)
        vmin = jnp.where(improved, vl, vmin)
        counter = jnp.where(improved, jnp.int32(0), counter + jnp.int32(1))
        stop = jnp.where(
            jnp.logical_and(jnp.logical_not(improved), counter >= patience),
            jnp.int32(1), stop)
        has_best = jnp.int32(1)
        # TODO(synk): save_checkpoint() (torch.save of model.state_dict()) has no Pallas
        # equivalent; in the reference it fires exactly when `improved` is True.
        return best, vmin, counter, stop, has_best

    init = (fstate_ref[0], fstate_ref[1],
            istate_ref[0], istate_ref[1], istate_ref[2])
    best, vmin, counter, stop, has_best = lax.fori_loop(0, n, body, init)

    fout_ref[0] = best
    fout_ref[1] = vmin
    iout_ref[0] = counter
    iout_ref[1] = stop
    iout_ref[2] = has_best
    iout_ref[3] = jnp.int32(0)


@jax.jit
def _early_stopping_padded(fstate, istate, vloss_padded, n, delta, patience):
    return pl.pallas_call(
        _early_stopping_kernel,
        out_shape=(jax.ShapeDtypeStruct((2,), jnp.float32),
                   jax.ShapeDtypeStruct((4,), jnp.int32)),
        in_specs=[pl.BlockSpec(memory_space=pltpu.MemorySpace.SMEM)] * 6,
        out_specs=(pl.BlockSpec(memory_space=pltpu.MemorySpace.SMEM),
                   pl.BlockSpec(memory_space=pltpu.MemorySpace.SMEM)),
        input_output_aliases={0: 0, 1: 1},          # update the state buffers in place
    )(fstate, istate, vloss_padded, n, delta, patience)


def early_stopping_run(fstate, istate, val_losses, delta, patience):
    """Run len(val_losses) EarlyStopping.__call__ updates; chunks of MAX_HISTORY reuse
    one fixed-shape kernel (no per-length recompiles)."""
    vl = np.asarray(val_losses, np.float32).reshape(-1)
    for off in range(0, len(vl), MAX_HISTORY):
        chunk = vl[off:off + MAX_HISTORY]
        padded = np.zeros((MAX_HISTORY,), np.float32)
        padded[:chunk.shape[0]] = chunk
        fstate, istate = _early_stopping_padded(
            fstate, istate,
            jnp.asarray(padded),
            jnp.asarray([chunk.shape[0]], jnp.int32),
            jnp.asarray([delta], jnp.float32),
            jnp.asarray([patience], jnp.int32))
    return fstate, istate


# ----------------------------------------------------------------------------
# TrainerBase equivalent (JAX side).  forward() is a no-op, as in PyTorch.
# ----------------------------------------------------------------------------
class TrainerBaseJAX:
    # type2 default schedule from the reference implementation (host-side dict).
    _TYPE2_DEFAULT = {5: 1e-4, 10: 5e-5, 20: 1e-5, 25: 5e-6, 30: 1e-6, 35: 5e-7, 40: 1e-8}

    def __init__(self, epoches, patience=7, delta=0.0, lr_types="type1", lr_adjust=None):
        if epoches is None:
            raise ValueError("Please input the total number of training iterations")
        self.epoches = int(epoches)
        self.patience = int(patience)
        self.delta = float(delta)
        self.types = lr_types
        self.lr_adjust = lr_adjust
        # EarlyStopping init: best_score=None -> has_best=0, counter=0,
        # early_stop=False, val_loss_min=+inf
        self.es_fstate = jnp.array([0.0, np.inf], dtype=jnp.float32)   # best, vmin
        self.es_istate = jnp.zeros((4,), dtype=jnp.int32)              # counter, stop, has_best, pad
        # TODO(synk): train_loader / optimizer / device are host-side Python objects
        # (data loading, param_group['lr'] mutation, checkpoint I/O); no device compute.

    def adjust_learning_rate(self, base_lr, start_epoch=1, num_epochs=None):
        if self.types == "type1":
            n = self.epoches if num_epochs is None else int(num_epochs)
            return adjust_learning_rate_type1(
                jnp.int32(start_epoch), jnp.float32(base_lr), num_epochs=n)
        elif self.types == "type2":
            # Pure host-side dict lookup in the reference; no device compute.
            # TODO(synk): optimizer.param_groups['lr'] mutation has no Pallas equivalent.
            return self.lr_adjust if self.lr_adjust is not None else self._TYPE2_DEFAULT
        raise ValueError("Please select from {type1 or type2}")

    def early_stopping_history(self, val_losses):
        """Preferred API: consume a whole validation-loss history in one launch."""
        self.es_fstate, self.es_istate = early_stopping_run(
            self.es_fstate, self.es_istate, val_losses, self.delta, self.patience)
        return self.es_fstate, self.es_istate

    def early_stopping(self, val_loss):
        """Single __call__-equivalent step (same fixed-shape kernel, length-1 history).
        Prefer early_stopping_history() in hot loops to amortize dispatch."""
        return self.early_stopping_history([float(val_loss)])

    @property
    def early_stop(self):
        return bool(self.es_istate[1] > 0)

    def forward(self, model, *args, **kwargs):
        # PyTorch forward body is `pass` -> returns None.  Nothing to compute.
        return None


if __name__ == "__main__":
    key = jax.random.PRNGKey(0)

    # ---- type1 LR schedule over 25 epochs (covers decade boundaries 11, 21) -----
    trainer = TrainerBaseJAX(epoches=25, patience=3, delta=0.0, lr_types="type1")
    lrs = jax.block_until_ready(trainer.adjust_learning_rate(base_lr=1e-3))
    epochs = jnp.arange(1, 26)
    lr_ref = (1e-3 * 0.1 ** ((epochs - 1) // 10)).astype(jnp.float32)
    assert lrs.shape == (25,), lrs.shape
    assert jnp.allclose(lrs, lr_ref, rtol=1e-5), (lrs, lr_ref)

    # ---- EarlyStopping over an 8-epoch validation-loss history -------------------
    val_losses = 1.0 + 0.1 * jax.random.normal(key, (8,), dtype=jnp.float32)
    # make the tail non-improving so the counter advances to patience
    val_losses = val_losses.at[4:].set(val_losses[:4].min() + 0.5)

    fstate, istate = trainer.early_stopping_history(val_losses)
    fstate = jax.block_until_ready(fstate)
    istate = jax.block_until_ready(istate)

    # host-side reference of the PyTorch EarlyStopping logic
    best, counter, stop, vmin = None, 0, False, float("inf")
    for vl in [float(v) for v in np.asarray(val_losses)]:
        score = -vl
        if best is None or score >= best + 0.0:
            best, counter, vmin = score, 0, vl
        else:
            counter += 1
            if counter >= 3:
                stop = True
    ref_f = np.array([best, vmin], np.float32)
    ref_i = np.array([counter, int(stop), 1, 0], np.int32)
    assert np.allclose(np.asarray(fstate), ref_f, rtol=1e-6, atol=1e-6), (fstate, ref_f)
    assert np.array_equal(np.asarray(istate), ref_i), (istate, ref_i)
    assert trainer.early_stop

    # single-step API (same fixed-shape kernel, length-1 chunks) matches the fused run
    trainer2 = TrainerBaseJAX(epoches=25, patience=3, delta=0.0, lr_types="type1")
    for vl in [float(v) for v in np.asarray(val_losses)]:
        trainer2.early_stopping(vl)
    f2 = jax.block_until_ready(trainer2.es_fstate)
    i2 = jax.block_until_ready(trainer2.es_istate)
    assert np.allclose(np.asarray(f2), np.asarray(fstate), rtol=1e-6, atol=1e-6), (f2, fstate)
    assert np.array_equal(np.asarray(i2), np.asarray(istate)), (i2, istate)

    # forward() mirrors the PyTorch no-op
    assert trainer.forward(model=None) is None

    print("KERNEL_OK")
</pallas_src>

<mosaic_0001>
module attributes {stable_mosaic.version = 11 : i64} {
  func.func @_lr_type1_kernel(%arg0: memref<1xi32, #tpu.memory_space<smem>>, %arg1: memref<1xf32, #tpu.memory_space<smem>>, %arg2: memref<8x128xf32, #tpu.memory_space<vmem>>) attributes {dimension_semantics = [], scalar_prefetch = 0 : i64, scratch_operands = 0 : i64, tpu.core_type = #tpu.core_type<tc>} {
    %0 = tpu.iota {dimensions = array<i32: 0>} : vector<8x128xi32>
    %1 = tpu.iota {dimensions = array<i32: 1>} : vector<8x128xi32>
    %c0 = arith.constant 0 : index
    %2 = memref.load %arg0[%c0] : memref<1xi32, #tpu.memory_space<smem>>
    %c1_i32 = arith.constant 1 : i32
    %3 = arith.subi %2, %c1_i32 : i32
    %c128_i32 = arith.constant 128 : i32
    %4 = vector.broadcast %c128_i32 : i32 to vector<8x128xi32>
    %5 = arith.muli %0, %4 : vector<8x128xi32>
    %6 = vector.broadcast %3 : i32 to vector<8x128xi32>
    %7 = arith.addi %6, %5 : vector<8x128xi32>
    %8 = arith.addi %7, %1 : vector<8x128xi32>
    %9 = arith.sitofp %8 : vector<8x128xi32> to vector<8x128xf32>
    %cst = arith.constant 1.000000e-01 : f32
    %10 = vector.broadcast %cst : f32 to vector<8x128xf32>
    %11 = arith.mulf %9, %10 : vector<8x128xf32>
    %12 = math.floor %11 : vector<8x128xf32>
    %cst_0 = arith.constant 1.000000e+01 : f32
    %13 = vector.broadcast %cst_0 : f32 to vector<8x128xf32>
    %14 = arith.mulf %12, %13 : vector<8x128xf32>
    %15 = arith.cmpf ogt, %14, %9 : vector<8x128xf32>
    %cst_1 = arith.constant 1.000000e+00 : f32
    %16 = vector.broadcast %cst_1 : f32 to vector<8x128xf32>
    %17 = arith.subf %12, %16 : vector<8x128xf32>
    %18 = arith.select %15, %17, %12 : vector<8x128xi1>, vector<8x128xf32>
    %cst_2 = arith.constant 1.000000e+00 : f32
    %19 = vector.broadcast %cst_2 : f32 to vector<8x128xf32>
    %20 = arith.addf %18, %19 : vector<8x128xf32>
    %cst_3 = arith.constant 1.000000e+01 : f32
    %21 = vector.broadcast %cst_3 : f32 to vector<8x128xf32>
    %22 = arith.mulf %20, %21 : vector<8x128xf32>
    %23 = arith.cmpf ole, %22, %9 : vector<8x128xf32>
    %cst_4 = arith.constant 1.000000e+00 : f32
    %24 = vector.broadcast %cst_4 : f32 to vector<8x128xf32>
    %25 = arith.addf %18, %24 : vector<8x128xf32>
    %26 = arith.select %23, %25, %18 : vector<8x128xi1>, vector<8x128xf32>
    %c0_5 = arith.constant 0 : index
    %27 = memref.load %arg1[%c0_5] : memref<1xf32, #tpu.memory_space<smem>>
    %cst_6 = arith.constant -2.30258512 : f32
    %28 = vector.broadcast %cst_6 : f32 to vector<8x128xf32>
    %29 = arith.mulf %26, %28 : vector<8x128xf32>
    %30 = math.exp %29 : vector<8x128xf32>
    %31 = vector.broadcast %27 : f32 to vector<8x128xf32>
    %32 = arith.mulf %31, %30 : vector<8x128xf32>
    %c0_7 = arith.constant 0 : index
    %c0_8 = arith.constant 0 : index
    %33 = vector.load %arg2[%c0_7, %c0_8] : memref<8x128xf32, #tpu.memory_space<vmem>>, vector<8x128xf32>
    tpu.vector_store %arg2[%c0_7, %c0_8], %32 {strides = array<i32>} : memref<8x128xf32, #tpu.memory_space<vmem>>, vector<8x128xf32>,
    return
  }
}

</mosaic_0001>

<llo_original>
// kernel: adjust_learning_rate_type1.1
$region0: #{adjust_learning_rate_type1.1}
  #allocation0 [shape = 'u32[]', space=smem, size = 0x4, offset = 0x4, fixed_abs, tag = 'smem constant byte address 0x4 - core index']
  #allocation1 [shape = 'u32[144,128]{1,0:T(1,128)}', space=vmem, size = 0x12000, scoped, tag = 'internal scratch']
  #allocation2 [shape = 's32[1]{0:T(128)S(6)}', space=smem, size = 0x200, scoped, tag = 'scoped memory for adjust_learning_rate_type1.1']
  #allocation3 [shape = 'f32[1]{0:T(128)S(6)}', space=smem, size = 0x200, scoped, tag = 'scoped memory for adjust_learning_rate_type1.1']
  %s0 = inlined_call_operand.<no memory space> [shape: s32[1], index: 0, kind: input, shape index: {}]
  %s1 = inlined_call_operand.<no memory space> [shape: f32[1], index: 1, kind: input, shape index: {}]
  %s2 = inlined_call_operand.vmem [shape: f32[8,128], index: 2, kind: output, shape index: {}]
  %s3 = sld [smem:[#allocation0]]
  $region18: #{adjust_learning_rate_type1.1} parent=0
    _
  %s5 = ssub.s32 1, %s3
  %s6 = scalar_select 0, %s5, %s3
  %7 = sst [smem:[#allocation2]] %s0
  %8 = sst [smem:[#allocation3]] %s1
  // Predicated region
  $region2: #{adjust_learning_rate_type1.1} parent=0 // pred_check
    _
  $region3: #{adjust_learning_rate_type1.1} parent=0 // pred_check_branch
    %10 = sbr.rel (0) target = $region5
  $region4: #{adjust_learning_rate_type1.1} parent=0 // pred_region
    _
  $region5: #{adjust_learning_rate_type1.1} parent=0 // pred_fallthru
    _
  // Predicated region
  $region6: #{adjust_learning_rate_type1.1} parent=0 // pred_check
    _
  $region7: #{adjust_learning_rate_type1.1} parent=0 // pred_check_branch
    %12 = sbr.rel (0) target = $region9
  $region8: #{adjust_learning_rate_type1.1} parent=0 // pred_region
    _
  $region9: #{adjust_learning_rate_type1.1} parent=0 // pred_fallthru
    _
  %v13 = vlaneseq
  %v14 = vshrl.u32 %v13, 7
  %v15 = vlaneseq
  %v16 = vand.u32 %v15, 127
  %s17 = sld [smem:[#allocation2]]
  %s18 = ssub.s32 %s17, 1
  %v19 = vmul.u32 %v14, 128
  %v20 = vstv %s18
  %v21 = vadd.s32 %v20, %v19
  %v22 = vadd.s32 %v21, %v16
  %v23 = vcvt.s32.f32 %v22
  %v24 = vmul.f32 %v23, 0.1
  %v25 = vfloor.f32 %v24
  %v26 = vmul.f32 %v25, 10.0
  %vm27 = vcmp.gt.f32.partialorder %v26, %v23
  %v28 = vsub.f32 %v25, 1.0
  %v29 = vsel %vm27, %v28, %v25
  %v30 = vadd.f32 %v29, 1.0
  %v31 = vmul.f32 %v30, 10.0
  %vm32 = vcmp.le.f32.partialorder %v31, %v23
  %v33 = vsel %vm32, %v30, %v29
  %s34 = sld [smem:[#allocation3]]
  %v35 = vmul.f32 %v33, -2.3025851
  %v36 = vmul.f32 %v35, 1.442695
  %v37 = vpow.pop %v36
  %v38 = vstv %s34
  %v39 = vmul.f32 %v38, %v37
  %40 = vst [vmem:[%s2] sm:$0xff] %v39
  // Predicated region
  $region10: #{adjust_learning_rate_type1.1} parent=0 // pred_check
    _
  $region11: #{adjust_learning_rate_type1.1} parent=0 // pred_check_branch
    %42 = sbr.rel (0) target = $region13
  $region12: #{adjust_learning_rate_type1.1} parent=0 // pred_region
    _
  $region13: #{adjust_learning_rate_type1.1} parent=0 // pred_fallthru
    _
  // Predicated region
  $region14: #{adjust_learning_rate_type1.1} parent=0 // pred_check
    _
  $region15: #{adjust_learning_rate_type1.1} parent=0 // pred_check_branch
    %44 = sbr.rel (0) target = $region17
  $region16: #{adjust_learning_rate_type1.1} parent=0 // pred_region
    _
  $region17: #{adjust_learning_rate_type1.1} parent=0 // pred_fallthru
    _

</llo_original>
